<compile_context>
chip_gen: v7x
topology: tpu7x:2x2x1
jax: 0.10.0
libtpu: 0.0.40
codegen_flags: <defaults>
</compile_context>

<pallas_src>
import math
import functools

import jax
import jax.numpy as jnp
from jax.experimental import pallas as pl
from jax.experimental.pallas import tpu as pltpu


def _round_up(x, m):
    return (x + m - 1) // m * m


def _pick_chunk(tn):
    # Largest in-kernel gather chunk that divides the row tile (tn is a multiple of 8).
    for c in (256, 128, 64, 32, 16, 8):
        if tn % c == 0:
            return c
    return tn


# ---------------------------------------------------------------------------
# Pallas kernel:  out = x + proj_table[t]   (row gather via one-hot MXU matmul)
# ---------------------------------------------------------------------------
def _rte_kernel(x_ref, t_ref, tab_ref, o_ref, *, chunk):
    # x_ref/o_ref: (TN, H) f32 ; t_ref: (TN, 1) int32
    # tab_ref:     (3, L, H) bf16 — three bf16 planes of the f32 table,
    #              full table resident in VMEM across the whole grid.
    tn = x_ref.shape[0]
    L = tab_ref.shape[1]

    def body(c, carry):
        r0 = pl.multiple_of(c * chunk, chunk)
        idx = t_ref[pl.ds(r0, chunk), :]                                # (C, 1) i32
        col = jax.lax.broadcasted_iota(jnp.int32, (chunk, L), 1)        # (C, L)
        # Exact 0/1 one-hot (bf16) — row selection by matmul is therefore exact
        # per plane, accumulated in f32.
        onehot = jnp.where(col == idx, 1.0, 0.0).astype(jnp.bfloat16)   # (C, L)
        proj = jnp.dot(onehot, tab_ref[0], preferred_element_type=jnp.float32)
        proj = proj + jnp.dot(onehot, tab_ref[1], preferred_element_type=jnp.float32)
        proj = proj + jnp.dot(onehot, tab_ref[2], preferred_element_type=jnp.float32)
        o_ref[pl.ds(r0, chunk), :] = x_ref[pl.ds(r0, chunk), :] + proj
        return carry

    jax.lax.fori_loop(0, tn // chunk, body, 0)


def rel_temporal_encoding_pallas(x_flat, t_flat, tab_planes, *, tn=2048):
    """x_flat: (N, H) f32, t_flat: (N,) int, tab_planes: (3, L, H) bf16."""
    N, H = x_flat.shape
    L = tab_planes.shape[1]

    # Pad rows to a multiple of 8 (sublane granularity) so tiny N is safe.
    n_pad = _round_up(max(N, 8), 8)
    if n_pad != N:
        x_flat = jnp.pad(x_flat, ((0, n_pad - N), (0, 0)))
        t_flat = jnp.pad(t_flat, ((0, n_pad - N),))

    tn = min(tn, n_pad)
    chunk = _pick_chunk(tn)
    t2d = t_flat.reshape(n_pad, 1).astype(jnp.int32)

    out = pl.pallas_call(
        functools.partial(_rte_kernel, chunk=chunk),
        out_shape=jax.ShapeDtypeStruct((n_pad, H), x_flat.dtype),
        grid_spec=pltpu.PrefetchScalarGridSpec(
            num_scalar_prefetch=0,
            grid=(pl.cdiv(n_pad, tn),),
            in_specs=[
                pl.BlockSpec((tn, H), lambda i: (i, 0)),      # x tile  (streamed)
                pl.BlockSpec((tn, 1), lambda i: (i, 0)),      # t tile  (streamed)
                pl.BlockSpec((3, L, H), lambda i: (0, 0, 0)),  # table   (resident)
            ],
            out_specs=pl.BlockSpec((tn, H), lambda i: (i, 0)),
        ),
        compiler_params=pltpu.CompilerParams(
            dimension_semantics=("parallel",),    # megacore / v7x 2-TC sharding
        ),
    )(x_flat, t2d, tab_planes)
    return out[:N]


# ---------------------------------------------------------------------------
# Module parameters (deterministic, mirroring __init__)
# ---------------------------------------------------------------------------
def build_params(n_hid, max_len=240, key=jax.random.PRNGKey(0)):
    # Sinusoidal embedding table, reproducing the torch float32 arithmetic
    # (including the `10000 ** arange / n_hid / 2` operator precedence).
    position = jnp.arange(0.0, max_len, dtype=jnp.float32)[:, None]          # (max_len, 1)
    ar = jnp.arange(0.0, n_hid * 2, 2.0, dtype=jnp.float32)                   # (n_hid,)
    div_term = 1.0 / (jnp.power(jnp.float32(10000.0), ar) / n_hid / 2.0)      # (n_hid,)
    sin_part = jnp.sin(position * div_term) / math.sqrt(n_hid)                # (max_len, n_hid)
    cos_part = jnp.cos(position * div_term) / math.sqrt(n_hid)                # (max_len, n_hid)
    emb = jnp.zeros((max_len, n_hid * 2), dtype=jnp.float32)
    emb = emb.at[:, 0::2].set(sin_part)
    emb = emb.at[:, 1::2].set(cos_part)

    # nn.Linear(n_hid*2, n_hid): uniform(-1/sqrt(fan_in), 1/sqrt(fan_in))
    kw, kb = jax.random.split(key)
    fan_in = n_hid * 2
    bound = 1.0 / math.sqrt(fan_in)
    w = jax.random.uniform(kw, (fan_in, n_hid), jnp.float32, -bound, bound)   # stored (2H, H)
    b = jax.random.uniform(kb, (n_hid,), jnp.float32, -bound, bound)
    return emb, w, b


def precompute_proj_table(emb, w, b):
    """Fold Linear over the fixed embedding:  proj_table[t] == lin(emb[t]).

    Returns (proj_f32, planes_bf16) where planes_bf16 is a (3, L, H) split such
    that p0 + p1 + p2 reconstructs proj_f32 to ~2^-24 relative error, letting
    the kernel's one-hot gather run as fast bf16 MXU matmuls without losing
    float32 accuracy."""
    proj = emb @ w + b                                      # (L, H) f32, done once
    p0 = proj.astype(jnp.bfloat16)
    r1 = proj - p0.astype(jnp.float32)
    p1 = r1.astype(jnp.bfloat16)
    p2 = (r1 - p1.astype(jnp.float32)).astype(jnp.bfloat16)
    return proj, jnp.stack([p0, p1, p2])                    # (3, L, H) bf16


# ---------------------------------------------------------------------------
# Forward wrapper:  out = x + lin(drop(emb(t)))     (dropout = identity, eval mode)
# ---------------------------------------------------------------------------
@jax.jit
def rel_temporal_encoding(x, t, tab_planes):
    B, S, H = x.shape
    out_flat = rel_temporal_encoding_pallas(
        x.reshape(B * S, H), t.reshape(B * S), tab_planes)
    return out_flat.reshape(B, S, H)
    # TODO(synk): training-mode dropout (random mask on the embedding rows) is
    # not implemented; eval-mode (identity) semantics only.


if __name__ == "__main__":
    n_hid = 32
    max_len = 240
    B, S = 2, 8

    key = jax.random.PRNGKey(0)
    k_params, k_x, k_t = jax.random.split(key, 3)

    emb, w, b = build_params(n_hid, max_len, key=k_params)
    _, tab_planes = precompute_proj_table(emb, w, b)        # one-time, outside per-token path

    x = jax.random.normal(k_x, (B, S, n_hid), dtype=jnp.float32)
    t = jax.random.randint(k_t, (B, S), 0, max_len, dtype=jnp.int32)

    out = jax.block_until_ready(rel_temporal_encoding(x, t, tab_planes))

    # Reference in plain JAX, following the original module's math.
    ref = x + (jnp.take(emb, t.reshape(-1), axis=0) @ w + b).reshape(B, S, n_hid)
    assert jnp.allclose(out, ref, atol=1e-5, rtol=1e-5), "mismatch vs reference"

    print("KERNEL_OK")
</pallas_src>

<mosaic_0001>
module attributes {stable_mosaic.version = 11 : i64} {
  func.func @_rte_kernel(%arg0: i32, %arg1: memref<16x32xf32, #tpu.memory_space<vmem>>, %arg2: memref<16x1xi32, #tpu.memory_space<vmem>>, %arg3: memref<3x240x32xbf16, #tpu.memory_space<vmem>>, %arg4: memref<16x32xf32, #tpu.memory_space<vmem>>) attributes {dimension_semantics = [#tpu.dimension_semantics<parallel>], iteration_bounds = array<i64: 1>, scalar_prefetch = 0 : i64, scratch_operands = 0 : i64, tpu.core_type = #tpu.core_type<tc>, window_params = [{transform_indices = @transform_0, window_bounds = array<i64: 16, 32>}, {transform_indices = @transform_1, window_bounds = array<i64: 16, 1>}, {pipeline_mode = #tpu.pipeline_mode<synchronous>, transform_indices = @transform_2, window_bounds = array<i64: 3, 240, 32>}, {transform_indices = @transform_3, window_bounds = array<i64: 16, 32>}]} {
    %c0_i32 = arith.constant 0 : i32
    %c16_i32 = arith.constant 16 : i32
    %0 = arith.muli %c0_i32, %c16_i32 : i32
    %1 = tpu.assume_multiple %0, 16 : i32
    %2 = arith.index_cast %1 : i32 to index
    %c0 = arith.constant 0 : index
    %3 = vector.load %arg2[%2, %c0] : memref<16x1xi32, #tpu.memory_space<vmem>>, vector<16x1xi32>
    %4 = tpu.iota {dimensions = array<i32: 1>} : vector<16x240xi32>
    %5 = vector.broadcast %3 : vector<16x1xi32> to vector<16x240xi32>
    %6 = arith.cmpi eq, %4, %5 : vector<16x240xi32>
    %cst = arith.constant 1.000000e+00 : f32
    %cst_0 = arith.constant 0.000000e+00 : f32
    %7 = vector.broadcast %cst : f32 to vector<16x240xf32>
    %8 = vector.broadcast %cst_0 : f32 to vector<16x240xf32>
    %9 = arith.select %6, %7, %8 : vector<16x240xi1>, vector<16x240xf32>
    %10 = arith.truncf %9 : vector<16x240xf32> to vector<16x240xbf16>
    %c0_1 = arith.constant 0 : index
    %c0_2 = arith.constant 0 : index
    %c0_3 = arith.constant 0 : index
    %11 = vector.load %arg3[%c0_1, %c0_2, %c0_3] : memref<3x240x32xbf16, #tpu.memory_space<vmem>>, vector<1x240x32xbf16>
    %12 = vector.shape_cast %11 : vector<1x240x32xbf16> to vector<240x32xbf16>
    %cst_4 = arith.constant dense<0.000000e+00> : vector<16x32xf32>
    %13 = tpu.matmul %10, %12, %cst_4 {dimension_numbers = #tpu.dot_dimension_numbers<[1], [0], [0], [1], [0, 0, 1, 1], [], []>} : vector<16x240xbf16>, vector<240x32xbf16>, vector<16x32xf32> -> vector<16x32xf32>
    %c1 = arith.constant 1 : index
    %c0_5 = arith.constant 0 : index
    %c0_6 = arith.constant 0 : index
    %14 = vector.load %arg3[%c1, %c0_5, %c0_6] : memref<3x240x32xbf16, #tpu.memory_space<vmem>>, vector<1x240x32xbf16>
    %15 = vector.shape_cast %14 : vector<1x240x32xbf16> to vector<240x32xbf16>
    %cst_7 = arith.constant dense<0.000000e+00> : vector<16x32xf32>
    %16 = tpu.matmul %10, %15, %cst_7 {dimension_numbers = #tpu.dot_dimension_numbers<[1], [0], [0], [1], [0, 0, 1, 1], [], []>} : vector<16x240xbf16>, vector<240x32xbf16>, vector<16x32xf32> -> vector<16x32xf32>
    %17 = arith.addf %13, %16 : vector<16x32xf32>
    %c2 = arith.constant 2 : index
    %c0_8 = arith.constant 0 : index
    %c0_9 = arith.constant 0 : index
    %18 = vector.load %arg3[%c2, %c0_8, %c0_9] : memref<3x240x32xbf16, #tpu.memory_space<vmem>>, vector<1x240x32xbf16>
    %19 = vector.shape_cast %18 : vector<1x240x32xbf16> to vector<240x32xbf16>
    %cst_10 = arith.constant dense<0.000000e+00> : vector<16x32xf32>
    %20 = tpu.matmul %10, %19, %cst_10 {dimension_numbers = #tpu.dot_dimension_numbers<[1], [0], [0], [1], [0, 0, 1, 1], [], []>} : vector<16x240xbf16>, vector<240x32xbf16>, vector<16x32xf32> -> vector<16x32xf32>
    %21 = arith.addf %17, %20 : vector<16x32xf32>
    %22 = arith.index_cast %1 : i32 to index
    %c0_11 = arith.constant 0 : index
    %23 = vector.load %arg1[%22, %c0_11] : memref<16x32xf32, #tpu.memory_space<vmem>>, vector<16x32xf32>
    %24 = arith.addf %23, %21 : vector<16x32xf32>
    %25 = arith.index_cast %1 : i32 to index
    %c0_12 = arith.constant 0 : index
    %26 = vector.load %arg4[%25, %c0_12] : memref<16x32xf32, #tpu.memory_space<vmem>>, vector<16x32xf32>
    tpu.vector_store %arg4[%25, %c0_12], %24 {strides = array<i32>} : memref<16x32xf32, #tpu.memory_space<vmem>>, vector<16x32xf32>,
    %c1_i32 = arith.constant 1 : i32
    return
  }
  func.func @transform_0(%arg0: i32) -> (i32, i32) {
    %c0_i32 = arith.constant 0 : i32
    %c0_i32_0 = arith.constant 0 : i32
    return %arg0, %c0_i32 : i32, i32
  }
  func.func @transform_1(%arg0: i32) -> (i32, i32) {
    %c0_i32 = arith.constant 0 : i32
    %c0_i32_0 = arith.constant 0 : i32
    return %arg0, %c0_i32 : i32, i32
  }
  func.func @transform_2(%arg0: i32) -> (i32, i32, i32) {
    %c0_i32 = arith.constant 0 : i32
    %c0_i32_0 = arith.constant 0 : i32
    %c0_i32_1 = arith.constant 0 : i32
    %c0_i32_2 = arith.constant 0 : i32
    return %c0_i32, %c0_i32_0, %c0_i32_1 : i32, i32, i32
  }
  func.func @transform_3(%arg0: i32) -> (i32, i32) {
    %c0_i32 = arith.constant 0 : i32
    %c0_i32_0 = arith.constant 0 : i32
    return %arg0, %c0_i32 : i32, i32
  }
}

</mosaic_0001>

<llo_original>
// kernel: rel_temporal_encoding.1
$region0: #{rel_temporal_encoding.1}
  #allocation0 [shape = 'u32[]', space=smem, size = 0x4, offset = 0x4, fixed_abs, tag = 'smem constant byte address 0x4 - core index']
  #allocation1 [shape = 'u32[144,128]{1,0:T(1,128)}', space=vmem, size = 0x12000, scoped, tag = 'internal scratch']
  %s0 = inlined_call_operand.vmem [shape: f32[16,32], index: 0, kind: input, shape index: {}]
  %s1 = inlined_call_operand.vmem [shape: s32[16,1], index: 1, kind: input, shape index: {}]
  %s2 = inlined_call_operand.vmem [shape: bf16[3,240,32], index: 2, kind: input, shape index: {}]
  %s3 = inlined_call_operand.hbm [shape: f32[16,32], index: 3, kind: output, shape index: {}]
  %s4 = sld [smem:[#allocation0]]
  $region22: #{rel_temporal_encoding.1} parent=0
    _
  %s6 = ssub.s32 1, %s4
  %s7 = scalar_select 0, %s6, %s4
  $region1: #{rel_temporal_encoding.1} parent=0
    #allocation2 [shape = 'u8[8192]{0}', space=vmem, size = 0x2000, scoped, tag = 'output window, operand 0, single buffered']
    #allocation3 [shape = 's32[1]{0}', space=sflag, size = 0x4, scoped, tag = 'scoped memory for rel_temporal_encoding.1']
    %8 = vsyncpa [#allocation3], 0
    // Predicated region
    $region2: #{rel_temporal_encoding.1} parent=1 // pred_check
      _
    $region3: #{rel_temporal_encoding.1} parent=1 // pred_check_branch
      %10 = sbr.rel (0) target = $region5
    $region4: #{rel_temporal_encoding.1} parent=1 // pred_region
      _
    $region5: #{rel_temporal_encoding.1} parent=1 // pred_fallthru
      _
    // Predicated region
    $region6: #{rel_temporal_encoding.1} parent=1 // pred_check
      _
    $region7: #{rel_temporal_encoding.1} parent=1 // pred_check_branch
      %12 = sbr.rel (0) target = $region9
    $region8: #{rel_temporal_encoding.1} parent=1 // pred_region
      _
    $region9: #{rel_temporal_encoding.1} parent=1 // pred_fallthru
      _
    // Predicated region
    $region10: #{rel_temporal_encoding.1} parent=1 // pred_check
      _
    $region11: #{rel_temporal_encoding.1} parent=1 // pred_check_branch
      %14 = sbr.rel (0) target = $region13
    $region12: #{rel_temporal_encoding.1} parent=1 // pred_region
      _
    $region13: #{rel_temporal_encoding.1} parent=1 // pred_fallthru
      _
    %v16 = vld [vmem:[%s1] sm:$0xff]
    %v17 = vld [vmem:[%s1 + $0x8] sm:$0xff]
    %v18 = vlaneseq
    %v19 = vand.u32 %v18, 127
    %v20 = vadd.s32 %v19, 128
    %21 = vset.pattern.permute.xlu0 0
    %22 = vperm.xlu0 %21, %v16
    %v23 = vpop.permute.xlu0 %22
    %24 = vset.pattern.permute.xlu0 0
    %25 = vperm.xlu0 %24, %v17
    %v26 = vpop.permute.xlu0 %25
    %vm27 = vcmp.eq.s32.totalorder %v19, %v23
    %vm28 = vcmp.eq.s32.totalorder %v20, %v23
    %vm29 = vcmp.eq.s32.totalorder %v19, %v26
    %vm30 = vcmp.eq.s32.totalorder %v20, %v26
    %v31 = vsel %vm27, 1.0, 0.0
    %v32 = vsel %vm28, 1.0, 0.0
    %v33 = vsel %vm29, 1.0, 0.0
    %v34 = vsel %vm30, 1.0, 0.0
    %v35 = vpack.c.bf16 %v33, %v31
    %v36 = vpack.c.bf16 %v34, %v32
    %v37 = vld [vmem:[%s2] sm:$0xf]
    %v38 = vld [vmem:[%s2 + $0x4] sm:$0xf]
    %v39 = vld [vmem:[%s2 + $0x8] sm:$0xf]
    %v40 = vld [vmem:[%s2 + $0xc] sm:$0xf]
    %v41 = vld [vmem:[%s2 + $0x10] sm:$0xf]
    %v42 = vld [vmem:[%s2 + $0x14] sm:$0xf]
    %v43 = vld [vmem:[%s2 + $0x18] sm:$0xf]
    %v44 = vld [vmem:[%s2 + $0x1c] sm:$0xf]
    %v45 = vld [vmem:[%s2 + $0x20] sm:$0xf]
    %v46 = vld [vmem:[%s2 + $0x24] sm:$0xf]
    %v47 = vld [vmem:[%s2 + $0x28] sm:$0xf]
    %v48 = vld [vmem:[%s2 + $0x2c] sm:$0xf]
    %v49 = vld [vmem:[%s2 + $0x30] sm:$0xf]
    %v50 = vld [vmem:[%s2 + $0x34] sm:$0xf]
    %v51 = vld [vmem:[%s2 + $0x38] sm:$0xf]
    %v52 = vld [vmem:[%s2 + $0x3c] sm:$0xf]
    %v53 = vld [vmem:[%s2 + $0x40] sm:$0xf]
    %v54 = vld [vmem:[%s2 + $0x44] sm:$0xf]
    %v55 = vld [vmem:[%s2 + $0x48] sm:$0xf]
    %v56 = vld [vmem:[%s2 + $0x4c] sm:$0xf]
    %v57 = vld [vmem:[%s2 + $0x50] sm:$0xf]
    %v58 = vld [vmem:[%s2 + $0x54] sm:$0xf]
    %v59 = vld [vmem:[%s2 + $0x58] sm:$0xf]
    %v60 = vld [vmem:[%s2 + $0x5c] sm:$0xf]
    %v61 = vld [vmem:[%s2 + $0x60] sm:$0xf]
    %v62 = vld [vmem:[%s2 + $0x64] sm:$0xf]
    %v63 = vld [vmem:[%s2 + $0x68] sm:$0xf]
    %v64 = vld [vmem:[%s2 + $0x6c] sm:$0xf]
    %v65 = vld [vmem:[%s2 + $0x70] sm:$0xf]
    %v66 = vld [vmem:[%s2 + $0x74] sm:$0xf]
    %s67 = scalar_lea.vmem %s2, 120
    %v68 = vld [vmem:[%s67] sm:$0xf]
    %v69 = vld [vmem:[%s67 + $0x4] sm:$0xf]
    %v70 = vld [vmem:[%s67 + $0x8] sm:$0xf]
    %v71 = vld [vmem:[%s67 + $0xc] sm:$0xf]
    %v72 = vld [vmem:[%s67 + $0x10] sm:$0xf]
    %v73 = vld [vmem:[%s67 + $0x14] sm:$0xf]
    %v74 = vld [vmem:[%s67 + $0x18] sm:$0xf]
    %v75 = vld [vmem:[%s67 + $0x1c] sm:$0xf]
    %v76 = vld [vmem:[%s67 + $0x20] sm:$0xf]
    %v77 = vld [vmem:[%s67 + $0x24] sm:$0xf]
    %v78 = vld [vmem:[%s67 + $0x28] sm:$0xf]
    %v79 = vld [vmem:[%s67 + $0x2c] sm:$0xf]
    %v80 = vld [vmem:[%s67 + $0x30] sm:$0xf]
    %v81 = vld [vmem:[%s67 + $0x34] sm:$0xf]
    %v82 = vld [vmem:[%s67 + $0x38] sm:$0xf]
    %v83 = vld [vmem:[%s67 + $0x3c] sm:$0xf]
    %v84 = vld [vmem:[%s67 + $0x40] sm:$0xf]
    %v85 = vld [vmem:[%s67 + $0x44] sm:$0xf]
    %v86 = vld [vmem:[%s67 + $0x48] sm:$0xf]
    %v87 = vld [vmem:[%s67 + $0x4c] sm:$0xf]
    %v88 = vld [vmem:[%s67 + $0x50] sm:$0xf]
    %v89 = vld [vmem:[%s67 + $0x54] sm:$0xf]
    %v90 = vld [vmem:[%s67 + $0x58] sm:$0xf]
    %v91 = vld [vmem:[%s67 + $0x5c] sm:$0xf]
    %v92 = vld [vmem:[%s67 + $0x60] sm:$0xf]
    %v93 = vld [vmem:[%s67 + $0x64] sm:$0xf]
    %v94 = vld [vmem:[%s67 + $0x68] sm:$0xf]
    %v95 = vld [vmem:[%s67 + $0x6c] sm:$0xf]
    %v96 = vld [vmem:[%s67 + $0x70] sm:$0xf]
    %v97 = vld [vmem:[%s67 + $0x74] sm:$0xf]
    %v128 = vunpack.c.l.b16 %v68
    %v129 = vunpack.c.l.b16 %v69
    %v130 = vunpack.c.l.b16 %v70
    %v131 = vunpack.c.l.b16 %v71
    %v132 = vunpack.c.l.b16 %v72
    %v133 = vunpack.c.l.b16 %v73
    %v134 = vunpack.c.l.b16 %v74
    %v135 = vunpack.c.l.b16 %v75
    %v136 = vunpack.c.l.b16 %v76
    %v137 = vunpack.c.l.b16 %v77
    %v138 = vunpack.c.l.b16 %v78
    %v139 = vunpack.c.l.b16 %v79
    %v140 = vunpack.c.l.b16 %v80
    %v141 = vunpack.c.l.b16 %v81
    %v142 = vunpack.c.l.b16 %v82
    %v143 = vunpack.c.l.b16 %v83
    %v144 = vunpack.c.l.b16 %v84
    %v145 = vunpack.c.l.b16 %v85
    %v146 = vunpack.c.l.b16 %v86
    %v147 = vunpack.c.l.b16 %v87
    %v148 = vunpack.c.l.b16 %v88
    %v149 = vunpack.c.l.b16 %v89
    %v150 = vunpack.c.l.b16 %v90
    %v151 = vunpack.c.l.b16 %v91
    %v152 = vunpack.c.l.b16 %v92
    %v153 = vunpack.c.l.b16 %v93
    %v154 = vunpack.c.l.b16 %v94
    %v155 = vunpack.c.l.b16 %v95
    %v156 = vunpack.c.l.b16 %v96
    %v157 = vunpack.c.l.b16 %v97
    %v158 = vpack.c.b16 %v129, %v128
    %v159 = vpack.c.b16 %v131, %v130
    %v160 = vpack.c.b16 %v133, %v132
    %v161 = vpack.c.b16 %v135, %v134
    %v162 = vpack.c.b16 %v137, %v136
    %v163 = vpack.c.b16 %v139, %v138
    %v164 = vpack.c.b16 %v141, %v140
    %v165 = vpack.c.b16 %v143, %v142
    %v166 = vpack.c.b16 %v145, %v144
    %v167 = vpack.c.b16 %v147, %v146
    %v168 = vpack.c.b16 %v149, %v148
    %v169 = vpack.c.b16 %v151, %v150
    %v170 = vpack.c.b16 %v153, %v152
    %v171 = vpack.c.b16 %v155, %v154
    %v172 = vpack.c.b16 %v157, %v156
    %vm188 = vcmask 916480
    %v190 = vsel %vm188, %v36, 0
    %192 = vmatprep.subr.bf16.mxu0 0
    %193 = vmatpush1.bf16.msra.mxu0 %v158
    %194 = vmatprep.subr.bf16.mxu0 0
    %195 = vmatpush1.bf16.msra.mxu0 %v159
    %196 = vmatprep.subr.bf16.mxu0 0
    %197 = vmatpush1.bf16.msra.mxu0 %v160
    %198 = vmatprep.subr.bf16.mxu0 0
    %199 = vmatpush1.bf16.msra.mxu0 %v161
    %200 = vmatprep.subr.bf16.mxu0 0
    %201 = vmatpush1.bf16.msra.mxu0 %v162
    %202 = vmatprep.subr.bf16.mxu0 0
    %203 = vmatpush1.bf16.msra.mxu0 %v163
    %204 = vmatprep.subr.bf16.mxu0 0
    %205 = vmatpush1.bf16.msra.mxu0 %v164
    %206 = vmatprep.subr.bf16.mxu0 0
    %207 = vmatpush1.bf16.msra.mxu0 %v165
    %208 = vmatprep.subr.bf16.mxu0 0
    %209 = vmatpush1.bf16.msra.mxu0 %v166
    %210 = vmatprep.subr.bf16.mxu0 0
    %211 = vmatpush1.bf16.msra.mxu0 %v167
    %212 = vmatprep.subr.bf16.mxu0 0
    %213 = vmatpush1.bf16.msra.mxu0 %v168
    %214 = vmatprep.subr.bf16.mxu0 0
    %215 = vmatpush1.bf16.msra.mxu0 %v169
    %216 = vmatprep.subr.bf16.mxu0 0
    %217 = vmatpush1.bf16.msra.mxu0 %v170
    %218 = vmatprep.subr.bf16.mxu0 0
    %219 = vmatpush1.bf16.msra.mxu0 %v171
    %220 = vmatprep.subr.bf16.mxu0 0
    %221 = vmatpush1.bf16.msra.mxu0 %v172
    %222 = vmatprep.subr.bf16.mxu0 0
    %223 = vmatpush1.bf16.msra.mxu0 0
    %224 = vmatprep.mubr.bf16.mxu0 %v190
    %225 = vmatmul.mubr.bf16.gmra.mrb[0].mxu0 %v35
    %v226 = vpop.f32.mrb[0].mxu0
    %v227 = vadd.f32 0.0, %v226
    %v228 = vpop.f32.mrb[0].mxu0
    %v229 = vpop.f32.mrb[0].mxu0
    %v230 = vadd.f32 0.0, %v229
    %v231 = vpop.f32.mrb[0].mxu0
    %232 = vdwg.mxu0
    %v263 = vunpack.c.l.b16 %v37
    %v264 = vunpack.c.l.b16 %v38
    %v265 = vunpack.c.l.b16 %v39
    %v266 = vunpack.c.l.b16 %v40
    %v267 = vunpack.c.l.b16 %v41
    %v268 = vunpack.c.l.b16 %v42
    %v269 = vunpack.c.l.b16 %v43
    %v270 = vunpack.c.l.b16 %v44
    %v271 = vunpack.c.l.b16 %v45
    %v272 = vunpack.c.l.b16 %v46
    %v273 = vunpack.c.l.b16 %v47
    %v274 = vunpack.c.l.b16 %v48
    %v275 = vunpack.c.l.b16 %v49
    %v276 = vunpack.c.l.b16 %v50
    %v277 = vunpack.c.l.b16 %v51
    %v278 = vunpack.c.l.b16 %v52
    %v279 = vunpack.c.l.b16 %v53
    %v280 = vunpack.c.l.b16 %v54
    %v281 = vunpack.c.l.b16 %v55
    %v282 = vunpack.c.l.b16 %v56
    %v283 = vunpack.c.l.b16 %v57
    %v284 = vunpack.c.l.b16 %v58
    %v285 = vunpack.c.l.b16 %v59
    %v286 = vunpack.c.l.b16 %v60
    %v287 = vunpack.c.l.b16 %v61
    %v288 = vunpack.c.l.b16 %v62
    %v289 = vunpack.c.l.b16 %v63
    %v290 = vunpack.c.l.b16 %v64
    %v291 = vunpack.c.l.b16 %v65
    %v292 = vunpack.c.l.b16 %v66
    %v293 = vpack.c.b16 %v264, %v263
    %v294 = vpack.c.b16 %v266, %v265
    %v295 = vpack.c.b16 %v268, %v267
    %v296 = vpack.c.b16 %v270, %v269
    %v297 = vpack.c.b16 %v272, %v271
    %v298 = vpack.c.b16 %v274, %v273
    %v299 = vpack.c.b16 %v276, %v275
    %v300 = vpack.c.b16 %v278, %v277
    %v301 = vpack.c.b16 %v280, %v279
    %v302 = vpack.c.b16 %v282, %v281
    %v303 = vpack.c.b16 %v284, %v283
    %v304 = vpack.c.b16 %v286, %v285
    %v305 = vpack.c.b16 %v288, %v287
    %v306 = vpack.c.b16 %v290, %v289
    %v307 = vpack.c.b16 %v292, %v291
    %323 = vmatprep.subr.bf16.mxu0 0
    %324 = vmatpush1.bf16.msra.mxu0 %v293
    %325 = vmatprep.subr.bf16.mxu0 0
    %326 = vmatpush1.bf16.msra.mxu0 %v294
    %327 = vmatprep.subr.bf16.mxu0 0
    %328 = vmatpush1.bf16.msra.mxu0 %v295
    %329 = vmatprep.subr.bf16.mxu0 0
    %330 = vmatpush1.bf16.msra.mxu0 %v296
    %331 = vmatprep.subr.bf16.mxu0 0
    %332 = vmatpush1.bf16.msra.mxu0 %v297
    %333 = vmatprep.subr.bf16.mxu0 0
    %334 = vmatpush1.bf16.msra.mxu0 %v298
    %335 = vmatprep.subr.bf16.mxu0 0
    %336 = vmatpush1.bf16.msra.mxu0 %v299
    %337 = vmatprep.subr.bf16.mxu0 0
    %338 = vmatpush1.bf16.msra.mxu0 %v300
    %339 = vmatprep.subr.bf16.mxu0 0
    %340 = vmatpush1.bf16.msra.mxu0 %v301
    %341 = vmatprep.subr.bf16.mxu0 0
    %342 = vmatpush1.bf16.msra.mxu0 %v302
    %343 = vmatprep.subr.bf16.mxu0 0
    %344 = vmatpush1.bf16.msra.mxu0 %v303
    %345 = vmatprep.subr.bf16.mxu0 0
    %346 = vmatpush1.bf16.msra.mxu0 %v304
    %347 = vmatprep.subr.bf16.mxu0 0
    %348 = vmatpush1.bf16.msra.mxu0 %v305
    %349 = vmatprep.subr.bf16.mxu0 0
    %350 = vmatpush1.bf16.msra.mxu0 %v306
    %351 = vmatprep.subr.bf16.mxu0 0
    %352 = vmatpush1.bf16.msra.mxu0 %v307
    %353 = vmatprep.subr.bf16.mxu0 0
    %354 = vmatpush1.bf16.msra.mxu0 0
    %355 = vmatprep.mubr.bf16.mxu0 %v190
    %356 = vmatmul.mubr.bf16.gmra.mrb[0].mxu0 %v35
    %v357 = vpop.f32.mrb[0].mxu0
    %v358 = vadd.f32 %v227, %v357
    %v359 = vpop.f32.mrb[0].mxu0
    %v360 = vpop.f32.mrb[0].mxu0
    %v361 = vadd.f32 %v230, %v360
    %v362 = vpop.f32.mrb[0].mxu0
    %363 = vdwg.mxu0
    %s364 = scalar_lea.vmem %s2, 240
    %v365 = vld [vmem:[%s364] sm:$0xf]
    %v366 = vld [vmem:[%s364 + $0x4] sm:$0xf]
    %v367 = vld [vmem:[%s364 + $0x8] sm:$0xf]
    %v368 = vld [vmem:[%s364 + $0xc] sm:$0xf]
    %v369 = vld [vmem:[%s364 + $0x10] sm:$0xf]
    %v370 = vld [vmem:[%s364 + $0x14] sm:$0xf]
    %v371 = vld [vmem:[%s364 + $0x18] sm:$0xf]
    %v372 = vld [vmem:[%s364 + $0x1c] sm:$0xf]
    %v373 = vld [vmem:[%s364 + $0x20] sm:$0xf]
    %v374 = vld [vmem:[%s364 + $0x24] sm:$0xf]
    %v375 = vld [vmem:[%s364 + $0x28] sm:$0xf]
    %v376 = vld [vmem:[%s364 + $0x2c] sm:$0xf]
    %v377 = vld [vmem:[%s364 + $0x30] sm:$0xf]
    %v378 = vld [vmem:[%s364 + $0x34] sm:$0xf]
    %v379 = vld [vmem:[%s364 + $0x38] sm:$0xf]
    %v380 = vld [vmem:[%s364 + $0x3c] sm:$0xf]
    %v381 = vld [vmem:[%s364 + $0x40] sm:$0xf]
    %v382 = vld [vmem:[%s364 + $0x44] sm:$0xf]
    %v383 = vld [vmem:[%s364 + $0x48] sm:$0xf]
    %v384 = vld [vmem:[%s364 + $0x4c] sm:$0xf]
    %v385 = vld [vmem:[%s364 + $0x50] sm:$0xf]
    %v386 = vld [vmem:[%s364 + $0x54] sm:$0xf]
    %v387 = vld [vmem:[%s364 + $0x58] sm:$0xf]
    %v388 = vld [vmem:[%s364 + $0x5c] sm:$0xf]
    %v389 = vld [vmem:[%s364 + $0x60] sm:$0xf]
    %v390 = vld [vmem:[%s364 + $0x64] sm:$0xf]
    %v391 = vld [vmem:[%s364 + $0x68] sm:$0xf]
    %v392 = vld [vmem:[%s364 + $0x6c] sm:$0xf]
    %v393 = vld [vmem:[%s364 + $0x70] sm:$0xf]
    %v394 = vld [vmem:[%s364 + $0x74] sm:$0xf]
    %v425 = vunpack.c.l.b16 %v365
    %v426 = vunpack.c.l.b16 %v366
    %v427 = vunpack.c.l.b16 %v367
    %v428 = vunpack.c.l.b16 %v368
    %v429 = vunpack.c.l.b16 %v369
    %v430 = vunpack.c.l.b16 %v370
    %v431 = vunpack.c.l.b16 %v371
    %v432 = vunpack.c.l.b16 %v372
    %v433 = vunpack.c.l.b16 %v373
    %v434 = vunpack.c.l.b16 %v374
    %v435 = vunpack.c.l.b16 %v375
    %v436 = vunpack.c.l.b16 %v376
    %v437 = vunpack.c.l.b16 %v377
    %v438 = vunpack.c.l.b16 %v378
    %v439 = vunpack.c.l.b16 %v379
    %v440 = vunpack.c.l.b16 %v380
    %v441 = vunpack.c.l.b16 %v381
    %v442 = vunpack.c.l.b16 %v382
    %v443 = vunpack.c.l.b16 %v383
    %v444 = vunpack.c.l.b16 %v384
    %v445 = vunpack.c.l.b16 %v385
    %v446 = vunpack.c.l.b16 %v386
    %v447 = vunpack.c.l.b16 %v387
    %v448 = vunpack.c.l.b16 %v388
    %v449 = vunpack.c.l.b16 %v389
    %v450 = vunpack.c.l.b16 %v390
    %v451 = vunpack.c.l.b16 %v391
    %v452 = vunpack.c.l.b16 %v392
    %v453 = vunpack.c.l.b16 %v393
    %v454 = vunpack.c.l.b16 %v394
    %v455 = vpack.c.b16 %v426, %v425
    %v456 = vpack.c.b16 %v428, %v427
    %v457 = vpack.c.b16 %v430, %v429
    %v458 = vpack.c.b16 %v432, %v431
    %v459 = vpack.c.b16 %v434, %v433
    %v460 = vpack.c.b16 %v436, %v435
    %v461 = vpack.c.b16 %v438, %v437
    %v462 = vpack.c.b16 %v440, %v439
    %v463 = vpack.c.b16 %v442, %v441
    %v464 = vpack.c.b16 %v444, %v443
    %v465 = vpack.c.b16 %v446, %v445
    %v466 = vpack.c.b16 %v448, %v447
    %v467 = vpack.c.b16 %v450, %v449
    %v468 = vpack.c.b16 %v452, %v451
    %v469 = vpack.c.b16 %v454, %v453
    %485 = vmatprep.subr.bf16.mxu0 0
    %486 = vmatpush1.bf16.msra.mxu0 %v455
    %487 = vmatprep.subr.bf16.mxu0 0
    %488 = vmatpush1.bf16.msra.mxu0 %v456
    %489 = vmatprep.subr.bf16.mxu0 0
    %490 = vmatpush1.bf16.msra.mxu0 %v457
    %491 = vmatprep.subr.bf16.mxu0 0
    %492 = vmatpush1.bf16.msra.mxu0 %v458
    %493 = vmatprep.subr.bf16.mxu0 0
    %494 = vmatpush1.bf16.msra.mxu0 %v459
    %495 = vmatprep.subr.bf16.mxu0 0
    %496 = vmatpush1.bf16.msra.mxu0 %v460
    %497 = vmatprep.subr.bf16.mxu0 0
    %498 = vmatpush1.bf16.msra.mxu0 %v461
    %499 = vmatprep.subr.bf16.mxu0 0
    %500 = vmatpush1.bf16.msra.mxu0 %v462
    %501 = vmatprep.subr.bf16.mxu0 0
    %502 = vmatpush1.bf16.msra.mxu0 %v463
    %503 = vmatprep.subr.bf16.mxu0 0
    %504 = vmatpush1.bf16.msra.mxu0 %v464
    %505 = vmatprep.subr.bf16.mxu0 0
    %506 = vmatpush1.bf16.msra.mxu0 %v465
    %507 = vmatprep.subr.bf16.mxu0 0
    %508 = vmatpush1.bf16.msra.mxu0 %v466
    %509 = vmatprep.subr.bf16.mxu0 0
    %510 = vmatpush1.bf16.msra.mxu0 %v467
    %511 = vmatprep.subr.bf16.mxu0 0
    %512 = vmatpush1.bf16.msra.mxu0 %v468
    %513 = vmatprep.subr.bf16.mxu0 0
    %514 = vmatpush1.bf16.msra.mxu0 %v469
    %515 = vmatprep.subr.bf16.mxu0 0
    %516 = vmatpush1.bf16.msra.mxu0 0
    %517 = vmatprep.mubr.bf16.mxu0 %v190
    %518 = vmatmul.mubr.bf16.gmra.mrb[0].mxu0 %v35
    %v519 = vpop.f32.mrb[0].mxu0
    %v520 = vadd.f32 0.0, %v519
    %v521 = vpop.f32.mrb[0].mxu0
    %v522 = vpop.f32.mrb[0].mxu0
    %v523 = vadd.f32 0.0, %v522
    %v524 = vpop.f32.mrb[0].mxu0
    %525 = vdwg.mxu0
    %v526 = vadd.f32 %v358, %v520
    %v527 = vadd.f32 %v361, %v523
    %v528 = vld [vmem:[%s0] sm:$0xff]
    %v529 = vld [vmem:[%s0 + $0x8] sm:$0xff]
    %v530 = vadd.f32 %v528, %v526
    %v531 = vadd.f32 %v529, %v527
    %vm532 = vcmask 261120
    %533 = vst.msk [vmem:[#allocation2] sm:$0xff] %vm532, %v530
    %534 = vst.msk [vmem:[#allocation2 + $0x8] sm:$0xff] %vm532, %v531
    // Predicated region
    $region14: #{rel_temporal_encoding.1} parent=1 // pred_check
      _
    $region15: #{rel_temporal_encoding.1} parent=1 // pred_check_branch
      %536 = sbr.rel (0) target = $region17
    $region16: #{rel_temporal_encoding.1} parent=1 // pred_region
      %s538 = ssub.s32 256, 256
      %539 = vsyncadd [#allocation3], %s538
      %s540 = sshll.u32 [#allocation2], 4
      %s541 = int_to_ptr.vmem [resolvable:$true] %s540
      %546 = dma.vmem_to_hbm [thread:$0]  %s541, 256, %s3, [#allocation3], 128, 128, 8
    $region17: #{rel_temporal_encoding.1} parent=1 // pred_fallthru
      _
    // Predicated region
    $region18: #{rel_temporal_encoding.1} parent=1 // pred_check
      _
    $region19: #{rel_temporal_encoding.1} parent=1 // pred_check_branch
      %548 = sbr.rel (0) target = $region21
    $region20: #{rel_temporal_encoding.1} parent=1 // pred_region
      %549 = dma.done [#allocation3], 256
    $region21: #{rel_temporal_encoding.1} parent=1 // pred_fallthru
      _
    %550 = vsyncpa [#allocation3], 1

</llo_original>
